<compile_context>
chip_gen: v6e
topology: v6e:2x2x1
jax: 0.10.0
libtpu: 0.0.40
codegen_flags: <defaults>
</compile_context>

<pallas_src>
import jax
import jax.numpy as jnp
from jax.experimental import pallas as pl
from jax.experimental.pallas import tpu as pltpu

# CLIP preprocessing constants (from normalize_imgs)
_MEAN = (0.48145466, 0.4578275, 0.40821073)
_STD = (0.26862954, 0.26130258, 0.27577711)

_HI = jax.lax.Precision.HIGHEST  # for the (host-side) fold + reference only


def _round_up(x, m):
    return (x + m - 1) // m * m


def _cdiv(a, b):
    return (a + b - 1) // b


# ----------------------------------------------------------------------------
# Fused kernel: bf16 patch-embed matmul (+folded normalization/bias)
# -> f32 L2 norm -> (block_n, E) accumulation; the finalize reduces the
# accumulator once and multiplies by the precomputed text-side vector.
# Grid = (core_split [parallel], batch_tiles_per_split [arbitrary]).
# ----------------------------------------------------------------------------
def _make_fused_kernel(n_actual, block_n, steps_per_split, has_padding):
    first_padded_tile = n_actual // block_n   # tiles before this are all valid

    def kernel(mp_ref, w_ref, b_ref, txt_ref, out_ref, acc_ref):
        s = pl.program_id(0)          # parallel (TensorCore split) axis
        j = pl.program_id(1)          # arbitrary (batch reduction) axis

        @pl.when(j == 0)
        def _():
            acc_ref[...] = jnp.zeros_like(acc_ref)

        # (block_n, PD) bf16 @ (PD, E) bf16 on the MXU, f32 accumulation;
        # bias is added post-MXU in f32.
        feat = jnp.dot(mp_ref[...], w_ref[...],
                       preferred_element_type=jnp.float32) + b_ref[...]
        inv_norm = jax.lax.rsqrt(
            jnp.sum(feat * feat, axis=-1, keepdims=True) + 1e-12)
        feat_n = feat * inv_norm

        if has_padding:
            g = s * steps_per_split + j    # global batch-tile index

            @pl.when(g < first_padded_tile)
            def _():
                acc_ref[...] += feat_n     # pure VPU add, no mask

            @pl.when(g >= first_padded_tile)
            def _():
                row = g * block_n + jax.lax.broadcasted_iota(
                    jnp.int32, feat_n.shape, 0)
                # where (not multiply) so any Inf/NaN in padded rows is dropped
                acc_ref[...] += jnp.where(row < n_actual, feat_n, 0.0)
        else:
            acc_ref[...] += feat_n

        @pl.when(j == pl.num_programs(1) - 1)
        def _():
            # single rows->1 reduce, then elementwise scale by the folded
            # exp(logit_scale)/(100*N*T) * sum_t text_t vector.
            out_ref[...] = (jnp.sum(acc_ref[...], axis=0, keepdims=True)
                            * txt_ref[...])

    return kernel


def _default_core_splits():
    """2 on v7x (two TensorCores per chip), 1 elsewhere (best effort)."""
    try:
        kind = jax.devices()[0].device_kind.lower()
    except Exception:
        return 1
    return 2 if "v7" in kind else 1


def clip_loss_fused(mean_patches, w_full, b_full, txt_sum, *,
                    block_n=512, num_core_splits=None):
    """loss = 1 - sum_E[(sum_n normalize(mp_n @ W + b)) * txt_sum]."""
    n, pd = mean_patches.shape
    e = w_full.shape[1]

    # bf16 MXU path -> batch tile rounded to a multiple of 16
    # (bf16 packs 2 rows per sublane).
    nb = _round_up(min(block_n, _round_up(n, 16)), 16)
    tiles = _cdiv(n, nb)

    if num_core_splits is None:
        num_core_splits = _default_core_splits()
    num_splits = num_core_splits if tiles >= 2 else 1
    steps = _cdiv(tiles, num_splits)
    n_pad = num_splits * steps * nb

    if n_pad != n:
        mean_patches = jnp.pad(mean_patches, ((0, n_pad - n), (0, 0)))
    mp = mean_patches.astype(jnp.bfloat16)
    w = w_full.astype(jnp.bfloat16)

    # VMEM budget: double-buffered bf16 mp tile, single-buffered invariants,
    # f32 accumulator + output block.  Explicit limit raises v5e's 16 MiB
    # scoped default; capped safely below v7x's 64 MiB physical VMEM.
    needed = (2 * nb * pd * 2      # mean-patch tile, bf16, double buffered
              + pd * e * 2         # folded weights, bf16, single buffered
              + e * 4              # folded bias, f32
              + e * 4              # txt_sum, f32
              + nb * e * 4         # accumulator scratch, f32
              + 2 * e * 4)         # (1, E) output block
    vmem_limit = int(min(max(2 * needed, 32 * 1024 * 1024),
                         48 * 1024 * 1024))

    partials = pl.pallas_call(
        _make_fused_kernel(n, nb, steps, n_pad != n),
        out_shape=jax.ShapeDtypeStruct((num_splits, e), jnp.float32),
        grid=(num_splits, steps),
        in_specs=[
            pl.BlockSpec((nb, pd), lambda s, j: (s * steps + j, 0)),
            pl.BlockSpec((pd, e), lambda s, j: (0, 0),
                         pipeline_mode=pl.Buffered(1)),      # folded weights
            pl.BlockSpec((1, e), lambda s, j: (0, 0),
                         pipeline_mode=pl.Buffered(1)),      # folded bias
            pl.BlockSpec((1, e), lambda s, j: (0, 0),
                         pipeline_mode=pl.Buffered(1)),      # txt_sum vector
        ],
        out_specs=pl.BlockSpec((1, e), lambda s, j: (s, 0)),
        scratch_shapes=[pltpu.VMEM((nb, e), jnp.float32)],
        compiler_params=pltpu.CompilerParams(
            dimension_semantics=("parallel", "arbitrary"),
            vmem_limit_bytes=vmem_limit),
    )(mp, w, b_full, txt_sum)

    # Tiny combine of the per-TensorCore partials (XLA glue).
    return 1.0 - jnp.sum(partials)


# ----------------------------------------------------------------------------
# Offline algebraic folds (done once at parameter construction)
# ----------------------------------------------------------------------------
def _fold_params(w1, b1, wproj, patch):
    """Fold normalize_imgs + W1 + Wproj into one (PD, E) affine map.

    normalize(x)_c = a_c*x + d_c with a_c = 0.5/std_c, d_c = (0.5-mean_c)/std_c.
    Mean-pooling commutes with the linear embed, so
        img_enc = mean_patches(raw) @ W_full + b_full
    with W_full = (a * W1) @ Wproj and b_full = (b1 + d @ W1) @ Wproj.
    """
    pp = patch * patch
    a = jnp.repeat(jnp.asarray([0.5 / s for s in _STD], jnp.float32), pp)
    d = jnp.repeat(jnp.asarray([(0.5 - m) / s for m, s in zip(_MEAN, _STD)],
                               jnp.float32), pp)
    w1_scaled = w1 * a[:, None]
    b1_shift = b1 + jnp.dot(d[None, :], w1, precision=_HI)
    w_full = jnp.dot(w1_scaled, wproj, precision=_HI)
    b_full = jnp.dot(b1_shift, wproj, precision=_HI)
    return w_full, b_full


def _patch_mean(imgs, patch):
    """Mean over the patch grid of the patchified image -> (N, C*P*P)."""
    n, c, r, _ = imgs.shape
    g = r // patch
    x = imgs.reshape(n, c, g, patch, g, patch)
    return jnp.mean(x, axis=(2, 4)).reshape(n, c * patch * patch)


class ManualClipLossPallas:
    """Synthetic, deterministic stand-in for ManualClipLoss."""
    # TODO(synk): the real CLIP ViT-B/32 image/text towers (12 transformer
    # blocks, cls token, LayerNorms, pretrained weights, clip.tokenize) cannot
    # be reproduced here; the image encoder is a synthetic
    # patchify -> linear -> mean-pool -> project.

    def __init__(self, key, *, resolution=32, patch=8, width=64, embed_dim=128):
        self.resolution = resolution      # model.visual.input_resolution analogue
        self.patch = patch
        patch_dim = 3 * patch * patch
        k1, k2 = jax.random.split(key, 2)
        self.w1 = (jax.random.normal(k1, (patch_dim, width), jnp.float32)
                   * (1.0 / jnp.sqrt(patch_dim)))
        self.b1 = jnp.zeros((1, width), jnp.float32)
        self.wproj = (jax.random.normal(k2, (width, embed_dim), jnp.float32)
                      * (1.0 / jnp.sqrt(width)))
        # CLIP's logit_scale parameter init: ln(1/0.07); forward uses .exp()
        self.logit_scale = jnp.full((1, 1), jnp.log(1.0 / 0.07), jnp.float32)
        # Offline fold: normalization + W1 + Wproj -> one affine map.
        self.w_full, self.b_full = _fold_params(self.w1, self.b1,
                                                self.wproj, patch)

    def forward(self, imgs, text_enc, *, block_n=512, num_core_splits=None):
        n = imgs.shape[0]
        t = text_enc.shape[0]
        # TODO(synk): at production CLIP sizes, profile this resize+pool XLA
        # glue (it touches the full image tensor) and fuse / stream image
        # tiles into the kernel if it dominates HBM traffic.
        imgs = jax.image.resize(
            imgs, (n, 3, self.resolution, self.resolution), method="bilinear")
        mean_patches = _patch_mean(imgs, self.patch)
        # Fold exp(logit_scale)/(100*N*T) and the text-side sum into one
        # (1, E) vector so neither the (T, E) text matrix nor a scalar has to
        # enter the kernel.
        txt_sum = (jnp.exp(self.logit_scale[0, 0]) / (100.0 * n * t)
                   ) * jnp.sum(text_enc, axis=0, keepdims=True)
        return clip_loss_fused(mean_patches, self.w_full, self.b_full,
                               txt_sum, block_n=block_n,
                               num_core_splits=num_core_splits)


# ----------------------------------------------------------------------------
# Pure-JAX reference (original un-fused formulation) for validation
# ----------------------------------------------------------------------------
def _patchify(imgs, patch):
    n, c, r, _ = imgs.shape
    g = r // patch
    x = imgs.reshape(n, c, g, patch, g, patch)
    x = jnp.transpose(x, (0, 2, 4, 1, 3, 5))          # (N, g, g, C, P, P)
    return x.reshape(n, g * g, c * patch * patch)


def _reference(model, imgs, text_enc):
    n = imgs.shape[0]
    x = jax.image.resize(imgs, (n, 3, model.resolution, model.resolution),
                         method="bilinear")
    x = (x + 1.0) / 2.0
    mean = jnp.asarray(_MEAN, jnp.float32).reshape(1, 3, 1, 1)
    std = jnp.asarray(_STD, jnp.float32).reshape(1, 3, 1, 1)
    x = (x - mean) / std
    p = _patchify(x, model.patch)
    tokens = jnp.einsum("npd,dw->npw", p, model.w1, precision=_HI) + model.b1[None]
    pooled = jnp.mean(tokens, axis=1)
    feat = jnp.dot(pooled, model.wproj, precision=_HI)
    feat = feat / jnp.linalg.norm(feat, axis=-1, keepdims=True)
    logits = jnp.exp(model.logit_scale[0, 0]) * jnp.dot(feat, text_enc.T,
                                                        precision=_HI)
    return jnp.mean(1.0 - logits / 100.0)


if __name__ == "__main__":
    key = jax.random.PRNGKey(0)
    k_img, k_txt, k_param = jax.random.split(key, 3)

    # images in [-1, 1] (as the (x+1)/2 in normalize_imgs implies), NCHW.
    # E=128 keeps the lane dimension fully utilized (real CLIP uses E=512).
    n, t, e = 34, 8, 128
    imgs = jnp.tanh(jax.random.normal(k_img, (n, 3, 16, 16), jnp.float32))

    model = ManualClipLossPallas(k_param, resolution=32, patch=8, width=64,
                                 embed_dim=e)

    # prep_texts output: unit-normalized text embeddings (T, embed_dim)
    text_enc = jax.random.normal(k_txt, (t, e), jnp.float32)
    text_enc = text_enc / jnp.linalg.norm(text_enc, axis=-1, keepdims=True)

    ref = _reference(model, imgs, text_enc)

    # Single-tile path (default block_n, auto core split).
    loss = jax.block_until_ready(model.forward(imgs, text_enc))
    # bf16 MXU inputs with f32 accumulation -> loosened tolerance vs the
    # HIGHEST-precision f32 reference.
    assert jnp.allclose(loss, ref, rtol=1e-2, atol=5e-3), (loss, ref)

    # Multi-tile path: exercises batch padding, the masked trailing tiles and
    # the two-way TensorCore split (serialized on 1-TC chips, sharded on v7x).
    loss2 = jax.block_until_ready(
        model.forward(imgs, text_enc, block_n=16, num_core_splits=2))
    assert jnp.allclose(loss2, ref, rtol=1e-2, atol=5e-3), (loss2, ref)

    print("KERNEL_OK")
</pallas_src>

<mosaic_0001>
module attributes {stable_mosaic.version = 11 : i64} {
  func.func @kernel(%arg0: i32, %arg1: i32, %arg2: memref<48x192xbf16, #tpu.memory_space<vmem>>, %arg3: memref<192x128xbf16, #tpu.memory_space<vmem>>, %arg4: memref<1x128xf32, #tpu.memory_space<vmem>>, %arg5: memref<1x128xf32, #tpu.memory_space<vmem>>, %arg6: memref<1x128xf32, #tpu.memory_space<vmem>>, %arg7: memref<48x128xf32, #tpu.memory_space<vmem>>) attributes {dimension_semantics = [#tpu.dimension_semantics<parallel>, #tpu.dimension_semantics<arbitrary>], iteration_bounds = array<i64: 1, 1>, scalar_prefetch = 0 : i64, scratch_operands = 1 : i64, tpu.core_type = #tpu.core_type<tc>, window_params = [{transform_indices = @transform_0, window_bounds = array<i64: 48, 192>}, {pipeline_mode = #tpu.pipeline_mode<synchronous>, transform_indices = @transform_1, window_bounds = array<i64: 192, 128>}, {pipeline_mode = #tpu.pipeline_mode<synchronous>, transform_indices = @transform_2, window_bounds = array<i64: 1, 128>}, {pipeline_mode = #tpu.pipeline_mode<synchronous>, transform_indices = @transform_3, window_bounds = array<i64: 1, 128>}, {transform_indices = @transform_4, window_bounds = array<i64: 1, 128>}]} {
    %c0_i32 = arith.constant 0 : i32
    %0 = arith.cmpi eq, %arg1, %c0_i32 : i32
    %1 = arith.extui %0 : i1 to i32
    %c0_i32_0 = arith.constant 0 : i32
    %2 = arith.cmpi ne, %1, %c0_i32_0 : i32
    scf.if %2 {
      %cst_14 = arith.constant 0.000000e+00 : f32
      %28 = vector.broadcast %cst_14 : f32 to vector<48x128xf32>
      %c0_15 = arith.constant 0 : index
      %c0_16 = arith.constant 0 : index
      %29 = vector.load %arg7[%c0_15, %c0_16] : memref<48x128xf32, #tpu.memory_space<vmem>>, vector<48x128xf32>
      tpu.vector_store %arg7[%c0_15, %c0_16], %28 {strides = array<i32>} : memref<48x128xf32, #tpu.memory_space<vmem>>, vector<48x128xf32>,
    } else {
    }
    %c0 = arith.constant 0 : index
    %c0_1 = arith.constant 0 : index
    %3 = vector.load %arg2[%c0, %c0_1] : memref<48x192xbf16, #tpu.memory_space<vmem>>, vector<48x192xbf16>
    %c0_2 = arith.constant 0 : index
    %c0_3 = arith.constant 0 : index
    %4 = vector.load %arg3[%c0_2, %c0_3] : memref<192x128xbf16, #tpu.memory_space<vmem>>, vector<192x128xbf16>
    %cst = arith.constant dense<0.000000e+00> : vector<48x128xf32>
    %5 = tpu.matmul %3, %4, %cst {dimension_numbers = #tpu.dot_dimension_numbers<[1], [0], [0], [1], [0, 0, 1, 1], [], []>} : vector<48x192xbf16>, vector<192x128xbf16>, vector<48x128xf32> -> vector<48x128xf32>
    %c0_4 = arith.constant 0 : index
    %c0_5 = arith.constant 0 : index
    %6 = vector.load %arg4[%c0_4, %c0_5] : memref<1x128xf32, #tpu.memory_space<vmem>>, vector<1x128xf32>
    %7 = vector.broadcast %6 : vector<1x128xf32> to vector<48x128xf32>
    %8 = arith.addf %5, %7 : vector<48x128xf32>
    %9 = arith.mulf %8, %8 : vector<48x128xf32>
    %cst_6 = arith.constant dense<0.000000e+00> : vector<48xf32>
    %10 = vector.multi_reduction <add>, %9, %cst_6 [1] : vector<48x128xf32> to vector<48xf32>
    %11 = vector.shape_cast %10 : vector<48xf32> to vector<48x1xf32>
    %cst_7 = arith.constant 9.99999996E-13 : f32
    %12 = vector.broadcast %cst_7 : f32 to vector<48x1xf32>
    %13 = arith.addf %11, %12 : vector<48x1xf32>
    %14 = math.rsqrt %13 : vector<48x1xf32>
    %15 = vector.broadcast %14 : vector<48x1xf32> to vector<48x128xf32>
    %16 = arith.mulf %8, %15 : vector<48x128xf32>
    %c1_i32 = arith.constant 1 : i32
    %17 = arith.muli %arg0, %c1_i32 : i32
    %18 = arith.addi %17, %arg1 : i32
    %c0_i32_8 = arith.constant 0 : i32
    %19 = arith.cmpi slt, %18, %c0_i32_8 : i32
    %20 = arith.extui %19 : i1 to i32
    %c0_i32_9 = arith.constant 0 : i32
    %21 = arith.cmpi ne, %20, %c0_i32_9 : i32
    scf.if %21 {
      %c0_14 = arith.constant 0 : index
      %c0_15 = arith.constant 0 : index
      %28 = vector.load %arg7[%c0_14, %c0_15] : memref<48x128xf32, #tpu.memory_space<vmem>>, vector<48x128xf32>
      %29 = arith.addf %28, %16 : vector<48x128xf32>
      %c0_16 = arith.constant 0 : index
      %c0_17 = arith.constant 0 : index
      %30 = vector.load %arg7[%c0_16, %c0_17] : memref<48x128xf32, #tpu.memory_space<vmem>>, vector<48x128xf32>
      tpu.vector_store %arg7[%c0_16, %c0_17], %29 {strides = array<i32>} : memref<48x128xf32, #tpu.memory_space<vmem>>, vector<48x128xf32>,
    } else {
    }
    %c0_i32_10 = arith.constant 0 : i32
    %22 = arith.cmpi sge, %18, %c0_i32_10 : i32
    %23 = arith.extui %22 : i1 to i32
    %c0_i32_11 = arith.constant 0 : i32
    %24 = arith.cmpi ne, %23, %c0_i32_11 : i32
    scf.if %24 {
      %c48_i32 = arith.constant 48 : i32
      %28 = arith.muli %18, %c48_i32 : i32
      %29 = tpu.iota {dimensions = array<i32: 0>} : vector<48x128xi32>
      %30 = vector.broadcast %28 : i32 to vector<48x128xi32>
      %31 = arith.addi %30, %29 : vector<48x128xi32>
      %c0_14 = arith.constant 0 : index
      %c0_15 = arith.constant 0 : index
      %32 = vector.load %arg7[%c0_14, %c0_15] : memref<48x128xf32, #tpu.memory_space<vmem>>, vector<48x128xf32>
      %c34_i32 = arith.constant 34 : i32
      %33 = vector.broadcast %c34_i32 : i32 to vector<48x128xi32>
      %34 = arith.cmpi slt, %31, %33 : vector<48x128xi32>
      %cst_16 = arith.constant 0.000000e+00 : f32
      %35 = vector.broadcast %cst_16 : f32 to vector<48x128xf32>
      %36 = arith.select %34, %16, %35 : vector<48x128xi1>, vector<48x128xf32>
      %37 = arith.addf %32, %36 : vector<48x128xf32>
      %c0_17 = arith.constant 0 : index
      %c0_18 = arith.constant 0 : index
      %38 = vector.load %arg7[%c0_17, %c0_18] : memref<48x128xf32, #tpu.memory_space<vmem>>, vector<48x128xf32>
      tpu.vector_store %arg7[%c0_17, %c0_18], %37 {strides = array<i32>} : memref<48x128xf32, #tpu.memory_space<vmem>>, vector<48x128xf32>,
    } else {
    }
    %c0_i32_12 = arith.constant 0 : i32
    %25 = arith.cmpi eq, %arg1, %c0_i32_12 : i32
    %26 = arith.extui %25 : i1 to i32
    %c0_i32_13 = arith.constant 0 : i32
    %27 = arith.cmpi ne, %26, %c0_i32_13 : i32
    scf.if %27 {
      %c0_14 = arith.constant 0 : index
      %c0_15 = arith.constant 0 : index
      %28 = vector.load %arg7[%c0_14, %c0_15] : memref<48x128xf32, #tpu.memory_space<vmem>>, vector<48x128xf32>
      %cst_16 = arith.constant dense<0.000000e+00> : vector<128xf32>
      %29 = vector.multi_reduction <add>, %28, %cst_16 [0] : vector<48x128xf32> to vector<128xf32>
      %30 = vector.shape_cast %29 : vector<128xf32> to vector<1x128xf32>
      %c0_17 = arith.constant 0 : index
      %c0_18 = arith.constant 0 : index
      %31 = vector.load %arg5[%c0_17, %c0_18] : memref<1x128xf32, #tpu.memory_space<vmem>>, vector<1x128xf32>
      %32 = arith.mulf %30, %31 : vector<1x128xf32>
      %c0_19 = arith.constant 0 : index
      %c0_20 = arith.constant 0 : index
      %33 = vector.load %arg6[%c0_19, %c0_20] : memref<1x128xf32, #tpu.memory_space<vmem>>, vector<1x128xf32>
      tpu.vector_store %arg6[%c0_19, %c0_20], %32 {strides = array<i32>} : memref<1x128xf32, #tpu.memory_space<vmem>>, vector<1x128xf32>,
    } else {
    }
    return
  }
  func.func @transform_0(%arg0: i32, %arg1: i32) -> (i32, i32) {
    %c1_i32 = arith.constant 1 : i32
    %0 = arith.muli %arg0, %c1_i32 : i32
    %1 = arith.addi %0, %arg1 : i32
    %c0_i32 = arith.constant 0 : i32
    %c0_i32_0 = arith.constant 0 : i32
    return %1, %c0_i32 : i32, i32
  }
  func.func @transform_1(%arg0: i32, %arg1: i32) -> (i32, i32) {
    %c0_i32 = arith.constant 0 : i32
    %c0_i32_0 = arith.constant 0 : i32
    %c0_i32_1 = arith.constant 0 : i32
    return %c0_i32, %c0_i32_0 : i32, i32
  }
  func.func @transform_2(%arg0: i32, %arg1: i32) -> (i32, i32) {
    %c0_i32 = arith.constant 0 : i32
    %c0_i32_0 = arith.constant 0 : i32
    %c0_i32_1 = arith.constant 0 : i32
    return %c0_i32, %c0_i32_0 : i32, i32
  }
  func.func @transform_3(%arg0: i32, %arg1: i32) -> (i32, i32) {
    %c0_i32 = arith.constant 0 : i32
    %c0_i32_0 = arith.constant 0 : i32
    %c0_i32_1 = arith.constant 0 : i32
    return %c0_i32, %c0_i32_0 : i32, i32
  }
  func.func @transform_4(%arg0: i32, %arg1: i32) -> (i32, i32) {
    %c0_i32 = arith.constant 0 : i32
    %c0_i32_0 = arith.constant 0 : i32
    return %arg0, %c0_i32 : i32, i32
  }
}

</mosaic_0001>

<llo_original>
// kernel: tpu_custom_call.1
$region0: #{tpu_custom_call.1}
  #allocation0 [shape = 'u32[]', space=smem, size = 0x4, offset = 0x4, fixed_abs, tag = 'smem constant byte address 0x4 - core index']
  #allocation1 [shape = 'u32[144,128]{1,0:T(1,128)}', space=vmem, size = 0x12000, scoped, tag = 'internal scratch']
  #allocation2 [shape = 'f32[48,128]{1,0:T(8,128)}', space=vmem, size = 0x6000, scoped, tag = 'scratch operand']
  %s0 = inlined_call_operand.hbm [shape: bf16[48,192], index: 0, kind: input, shape index: {}]
  %s1 = inlined_call_operand.hbm [shape: bf16[192,128], index: 1, kind: input, shape index: {}]
  %s2 = inlined_call_operand.vmem [shape: f32[1,128], index: 2, kind: input, shape index: {}]
  %s3 = inlined_call_operand.vmem [shape: f32[1,128], index: 3, kind: input, shape index: {}]
  %s4 = inlined_call_operand.hbm [shape: f32[1,128], index: 4, kind: output, shape index: {}]
  %s5 = sld [smem:[#allocation0]]
  $region50: #{tpu_custom_call.1} parent=0
    _
  %s7 = ssub.s32 1, %s5
  %s8 = scalar_select 0, %s7, %s5
  $region1: #{tpu_custom_call.1} parent=0
    #allocation3 [shape = 'u8[24576]{0}', space=vmem, size = 0x6000, scoped, tag = 'input window, operand 0, single buffered']
    #allocation4 [shape = 's32[1]{0}', space=sflag, size = 0x4, scoped, tag = 'scoped memory for tpu_custom_call.1']
    #allocation5 [shape = 's32[1]{0}', space=sflag, size = 0x4, scoped, tag = 'scoped memory for tpu_custom_call.1']
    #allocation6 [shape = 'u8[49152]{0}', space=vmem, size = 0xc000, scoped, tag = 'input window, operand 1, single buffered']
    #allocation7 [shape = 's32[1]{0}', space=sflag, size = 0x4, scoped, tag = 'scoped memory for tpu_custom_call.1']
    #allocation8 [shape = 'u8[512]{0}', space=vmem, size = 0x400, scoped, tag = 'output window, operand 0, single buffered']
    %9 = vsyncpa [#allocation4], 0
    %10 = vsyncpa [#allocation7], 0
    %11 = vsyncpa [#allocation5], 0
    // Predicated region
    $region2: #{tpu_custom_call.1} parent=1 // pred_check
      _
    $region3: #{tpu_custom_call.1} parent=1 // pred_check_branch
      %13 = sbr.rel (0) target = $region5
    $region4: #{tpu_custom_call.1} parent=1 // pred_region
      %s14 = sadd.s32 0, 0
      %s15 = smul.u32 6, %s14
      %s17 = ssub.s32 768, 768
      %18 = vsyncadd [#allocation4], %s17
      %s19 = smul.addr %s15, 2
      %s20 = smul.addr %s19, 64
      %s21 = scalar_lea.hbm %s0, %s20
      %s22 = sshll.u32 [#allocation3], 4
      %s23 = int_to_ptr.vmem [resolvable:$true] %s22
      %28 = dma.hbm_to_vmem [thread:$0]  %s21, 768, %s23, [#allocation4], 128, 128, 8
    $region5: #{tpu_custom_call.1} parent=1 // pred_fallthru
      _
    // Predicated region
    $region6: #{tpu_custom_call.1} parent=1 // pred_check
      _
    $region7: #{tpu_custom_call.1} parent=1 // pred_check_branch
      %30 = sbr.rel (0) target = $region9
    $region8: #{tpu_custom_call.1} parent=1 // pred_region
      %s32 = ssub.s32 1536, 1536
      %33 = vsyncadd [#allocation7], %s32
      %s34 = sshll.u32 [#allocation6], 4
      %s35 = int_to_ptr.vmem [resolvable:$true] %s34
      %40 = dma.hbm_to_vmem [thread:$0]  %s1, 1536, %s35, [#allocation7], 64, 64, 4
    $region9: #{tpu_custom_call.1} parent=1 // pred_fallthru
      _
    // Predicated region
    $region10: #{tpu_custom_call.1} parent=1 // pred_check
      _
    $region11: #{tpu_custom_call.1} parent=1 // pred_check_branch
      %42 = sbr.rel (0) target = $region13
    $region12: #{tpu_custom_call.1} parent=1 // pred_region
      _
    $region13: #{tpu_custom_call.1} parent=1 // pred_fallthru
      _
    // Predicated region
    $region14: #{tpu_custom_call.1} parent=1 // pred_check
      _
    $region15: #{tpu_custom_call.1} parent=1 // pred_check_branch
      %44 = sbr.rel (0) target = $region17
    $region16: #{tpu_custom_call.1} parent=1 // pred_region
      _
    $region17: #{tpu_custom_call.1} parent=1 // pred_fallthru
      _
    // Predicated region
    $region18: #{tpu_custom_call.1} parent=1 // pred_check
      _
    $region19: #{tpu_custom_call.1} parent=1 // pred_check_branch
      %46 = sbr.rel (0) target = $region21
    $region20: #{tpu_custom_call.1} parent=1 // pred_region
      %47 = dma.done [#allocation4], 768
    $region21: #{tpu_custom_call.1} parent=1 // pred_fallthru
      _
    // Predicated region
    $region22: #{tpu_custom_call.1} parent=1 // pred_check
      _
    $region23: #{tpu_custom_call.1} parent=1 // pred_check_branch
      %49 = sbr.rel (0) target = $region25
    $region24: #{tpu_custom_call.1} parent=1 // pred_region
      %50 = dma.done [#allocation7], 1536
    $region25: #{tpu_custom_call.1} parent=1 // pred_fallthru
      _
    %s51 = sadd.s32 0, 0
    %s52 = smul.u32 6, %s51
    %p54 = scmp.eq.s32.totalorder 0, 0
    // Predicated region
    $region26: #{tpu_custom_call.1} parent=1 // pred_check
      %p55 = pneg %p54
    $region27: #{tpu_custom_call.1} parent=1 // pred_check_branch
      %57 = sbr.rel (%p55) target = $region29
    $region28: #{tpu_custom_call.1} parent=1 // pred_region
      %58 = vst [vmem:[#allocation2] sm:$0xff] 0.0
      %59 = vst [vmem:[#allocation2 + $0x8] sm:$0xff] 0.0
      %60 = vst [vmem:[#allocation2 + $0x10] sm:$0xff] 0.0
      %61 = vst [vmem:[#allocation2 + $0x18] sm:$0xff] 0.0
      %62 = vst [vmem:[#allocation2 + $0x20] sm:$0xff] 0.0
      %63 = vst [vmem:[#allocation2 + $0x28] sm:$0xff] 0.0
    $region29: #{tpu_custom_call.1} parent=1 // pred_fallthru
      _
    %v64 = vld [vmem:[#allocation3] sm:$0xff]
    %v65 = vld [vmem:[#allocation3 + $0x8] sm:$0xff]
    %v66 = vld [vmem:[#allocation3 + $0x10] sm:$0xff]
    %v67 = vld [vmem:[#allocation3 + $0x18] sm:$0xff]
    %v68 = vld [vmem:[#allocation3 + $0x20] sm:$0xff]
    %v69 = vld [vmem:[#allocation3 + $0x28] sm:$0xff]
    %v70 = vld [vmem:[#allocation6] sm:$0xf]
    %v71 = vld [vmem:[#allocation6 + $0x4] sm:$0xf]
    %v72 = vld [vmem:[#allocation6 + $0x8] sm:$0xf]
    %v73 = vld [vmem:[#allocation6 + $0xc] sm:$0xf]
    %v74 = vld [vmem:[#allocation6 + $0x10] sm:$0xf]
    %v75 = vld [vmem:[#allocation6 + $0x14] sm:$0xf]
    %v76 = vld [vmem:[#allocation6 + $0x18] sm:$0xf]
    %v77 = vld [vmem:[#allocation6 + $0x1c] sm:$0xf]
    %v78 = vld [vmem:[#allocation6 + $0x20] sm:$0xf]
    %v79 = vld [vmem:[#allocation6 + $0x24] sm:$0xf]
    %v80 = vld [vmem:[#allocation6 + $0x28] sm:$0xf]
    %v81 = vld [vmem:[#allocation6 + $0x2c] sm:$0xf]
    %v82 = vld [vmem:[#allocation6 + $0x30] sm:$0xf]
    %v83 = vld [vmem:[#allocation6 + $0x34] sm:$0xf]
    %v84 = vld [vmem:[#allocation6 + $0x38] sm:$0xf]
    %v85 = vld [vmem:[#allocation6 + $0x3c] sm:$0xf]
    %v86 = vld [vmem:[#allocation6 + $0x40] sm:$0xf]
    %v87 = vld [vmem:[#allocation6 + $0x44] sm:$0xf]
    %v88 = vld [vmem:[#allocation6 + $0x48] sm:$0xf]
    %v89 = vld [vmem:[#allocation6 + $0x4c] sm:$0xf]
    %v90 = vld [vmem:[#allocation6 + $0x50] sm:$0xf]
    %v91 = vld [vmem:[#allocation6 + $0x54] sm:$0xf]
    %v92 = vld [vmem:[#allocation6 + $0x58] sm:$0xf]
    %v93 = vld [vmem:[#allocation6 + $0x5c] sm:$0xf]
    %v94 = vld [vmem:[%s2] sm:$0x1]
    %v96 = vlaneseq
    %v97 = vshrl.u32 %v96, 7
    %v98 = vsub.s32 0, %v97
    %v99 = vrot.slane %v94, %v98
    %v107 = vunpack.c.l.b16 %v64
    %v108 = vunpack.c.h.b16 %v64
    %v109 = vunpack.c.l.b16 %v65
    %v110 = vunpack.c.h.b16 %v65
    %v111 = vunpack.c.l.b16 %v66
    %v112 = vunpack.c.h.b16 %v66
    %v113 = vunpack.c.l.b16 %v67
    %v114 = vunpack.c.h.b16 %v67
    %v115 = vunpack.c.l.b16 %v68
    %v116 = vunpack.c.h.b16 %v68
    %v117 = vunpack.c.l.b16 %v69
    %v118 = vunpack.c.h.b16 %v69
    %v119 = vpack.c.b16 %v109, %v107
    %v120 = vpack.c.b16 %v110, %v108
    %v121 = vpack.c.b16 %v113, %v111
    %v122 = vpack.c.b16 %v114, %v112
    %v123 = vpack.c.b16 %v117, %v115
    %v124 = vpack.c.b16 %v118, %v116
    %v152 = vunpack.c.l.b16 %v70
    %v153 = vunpack.c.l.b16 %v71
    %v154 = vunpack.c.l.b16 %v72
    %v155 = vunpack.c.l.b16 %v73
    %v156 = vunpack.c.l.b16 %v74
    %v157 = vunpack.c.l.b16 %v75
    %v158 = vunpack.c.l.b16 %v76
    %v159 = vunpack.c.l.b16 %v77
    %v160 = vunpack.c.l.b16 %v78
    %v161 = vunpack.c.l.b16 %v79
    %v162 = vunpack.c.l.b16 %v80
    %v163 = vunpack.c.l.b16 %v81
    %v164 = vunpack.c.l.b16 %v82
    %v165 = vunpack.c.l.b16 %v83
    %v166 = vunpack.c.l.b16 %v84
    %v167 = vunpack.c.l.b16 %v85
    %v168 = vunpack.c.l.b16 %v86
    %v169 = vunpack.c.l.b16 %v87
    %v170 = vunpack.c.l.b16 %v88
    %v171 = vunpack.c.l.b16 %v89
    %v172 = vunpack.c.l.b16 %v90
    %v173 = vunpack.c.l.b16 %v91
    %v174 = vunpack.c.l.b16 %v92
    %v175 = vunpack.c.l.b16 %v93
    %v176 = vpack.c.b16 %v153, %v152
    %v177 = vpack.c.b16 %v155, %v154
    %v178 = vpack.c.b16 %v157, %v156
    %v179 = vpack.c.b16 %v159, %v158
    %v180 = vpack.c.b16 %v161, %v160
    %v181 = vpack.c.b16 %v163, %v162
    %v182 = vpack.c.b16 %v165, %v164
    %v183 = vpack.c.b16 %v167, %v166
    %v184 = vpack.c.b16 %v169, %v168
    %v185 = vpack.c.b16 %v171, %v170
    %v186 = vpack.c.b16 %v173, %v172
    %v187 = vpack.c.b16 %v175, %v174
    %vm200 = vcmask 523264
    %v202 = vsel %vm200, %v120, 0
    %v205 = vsel %vm200, %v122, 0
    %v208 = vsel %vm200, %v124, 0
    %210 = vmatprep.subr.bf16.mxu0 0
    %211 = vmatpush1.bf16.msra.mxu0 %v183
    %212 = vmatprep.subr.bf16.mxu0 0
    %213 = vmatpush1.bf16.msra.mxu0 %v182
    %214 = vmatprep.subr.bf16.mxu0 0
    %215 = vmatpush1.bf16.msra.mxu0 %v181
    %216 = vmatprep.subr.bf16.mxu0 0
    %217 = vmatpush1.bf16.msra.mxu0 %v180
    %218 = vmatprep.subr.bf16.mxu0 0
    %219 = vmatpush1.bf16.msra.mxu0 %v179
    %220 = vmatprep.subr.bf16.mxu0 0
    %221 = vmatpush1.bf16.msra.mxu0 %v178
    %222 = vmatprep.subr.bf16.mxu0 0
    %223 = vmatpush1.bf16.msra.mxu0 %v177
    %224 = vmatprep.subr.bf16.mxu0 0
    %225 = vmatpush1.bf16.msra.mxu0 %v176
    %226 = vmatprep.subr.bf16.mxu0 0
    %227 = vmatpush2.bf16.msra.mxu0 0
    %228 = vmatprep.subr.bf16.mxu0 0
    %229 = vmatpush2.bf16.msra.mxu0 0
    %230 = vmatprep.subr.bf16.mxu0 0
    %231 = vmatpush2.bf16.msra.mxu0 0
    %232 = vmatprep.subr.bf16.mxu0 0
    %233 = vmatpush2.bf16.msra.mxu0 0
    %234 = vmatprep.subr.bf16.mxu0 0
    %235 = vmatpush2.bf16.msra.mxu0 %v187
    %236 = vmatprep.subr.bf16.mxu0 0
    %237 = vmatpush2.bf16.msra.mxu0 %v186
    %238 = vmatprep.subr.bf16.mxu0 0
    %239 = vmatpush2.bf16.msra.mxu0 %v185
    %240 = vmatprep.subr.bf16.mxu0 0
    %241 = vmatpush2.bf16.msra.mxu0 %v184
    %242 = vmatprep.mubr.bf16.mxu0 %v202
    %243 = vmatmul.mubr.bf16.gmra.mxu0 %v119
    %v244 = vpop.f32.mrf.mxu0
    %v245 = vadd.f32 %v99, %v244
    %v246 = vpop.f32.mrf.mxu0
    %v247 = vpop.f32.mrf.mxu0
    %v248 = vadd.f32 %v99, %v247
    %v249 = vpop.f32.mrf.mxu0
    %250 = vmatprep.mubr.bf16.mxu0 %v205
    %251 = vmatmul.mubr.bf16.gmra.mxu0 %v121
    %v252 = vpop.f32.mrf.mxu0
    %v253 = vadd.f32 %v99, %v252
    %v254 = vpop.f32.mrf.mxu0
    %v255 = vpop.f32.mrf.mxu0
    %v256 = vadd.f32 %v99, %v255
    %v257 = vpop.f32.mrf.mxu0
    %258 = vmatprep.mubr.bf16.mxu0 %v208
    %259 = vmatmul.mubr.bf16.gmra.mxu0 %v123
    %v260 = vpop.f32.mrf.mxu0
    %v261 = vadd.f32 %v99, %v260
    %v262 = vpop.f32.mrf.mxu0
    %v263 = vpop.f32.mrf.mxu0
    %v264 = vadd.f32 %v99, %v263
    %v265 = vpop.f32.mrf.mxu0
    %266 = vdwg.mxu0
    %v267 = vmul.f32 %v245, %v245
    %v268 = vmul.f32 %v248, %v248
    %v269 = vmul.f32 %v253, %v253
    %v270 = vmul.f32 %v256, %v256
    %v271 = vmul.f32 %v261, %v261
    %v272 = vmul.f32 %v264, %v264
    %273 = vadd.xlane.f32.xlu0 %v267
    %v274 = vpop.xlane.xlu0 %273
    %275 = vadd.xlane.f32.xlu0 %v268
    %v276 = vpop.xlane.xlu0 %275
    %277 = vadd.xlane.f32.xlu0 %v269
    %v278 = vpop.xlane.xlu0 %277
    %279 = vadd.xlane.f32.xlu0 %v270
    %v280 = vpop.xlane.xlu0 %279
    %281 = vadd.xlane.f32.xlu0 %v271
    %v282 = vpop.xlane.xlu0 %281
    %283 = vadd.xlane.f32.xlu0 %v272
    %v284 = vpop.xlane.xlu0 %283
    %v285 = vadd.f32 %v274, 1e-12
    %v286 = vadd.f32 %v276, 1e-12
    %v287 = vadd.f32 %v278, 1e-12
    %v288 = vadd.f32 %v280, 1e-12
    %v289 = vadd.f32 %v282, 1e-12
    %v290 = vadd.f32 %v284, 1e-12
    %v291 = vrsqrt.pop %v285
    %v292 = vrsqrt.pop %v286
    %v293 = vrsqrt.pop %v287
    %v294 = vrsqrt.pop %v288
    %v295 = vrsqrt.pop %v289
    %v296 = vrsqrt.pop %v290
    %v297 = vmul.f32 %v245, %v291
    %v298 = vmul.f32 %v248, %v292
    %v299 = vmul.f32 %v253, %v293
    %v300 = vmul.f32 %v256, %v294
    %v301 = vmul.f32 %v261, %v295
    %v302 = vmul.f32 %v264, %v296
    %s303 = sadd.s32 0, 0
    %p304 = scmp.lt.s32.totalorder %s303, 0
    // Predicated region
    $region30: #{tpu_custom_call.1} parent=1 // pred_check
      %p305 = pneg %p304
    $region31: #{tpu_custom_call.1} parent=1 // pred_check_branch
      %307 = sbr.rel (%p305) target = $region33
    $region32: #{tpu_custom_call.1} parent=1 // pred_region
      %v308 = vld [vmem:[#allocation2] sm:$0xff]
      %v309 = vld [vmem:[#allocation2 + $0x8] sm:$0xff]
      %v310 = vld [vmem:[#allocation2 + $0x10] sm:$0xff]
      %v311 = vld [vmem:[#allocation2 + $0x18] sm:$0xff]
      %v312 = vld [vmem:[#allocation2 + $0x20] sm:$0xff]
      %v313 = vld [vmem:[#allocation2 + $0x28] sm:$0xff]
      %v314 = vadd.f32 %v308, %v297
      %v315 = vadd.f32 %v309, %v298
      %v316 = vadd.f32 %v310, %v299
      %v317 = vadd.f32 %v311, %v300
      %v318 = vadd.f32 %v312, %v301
      %v319 = vadd.f32 %v313, %v302
      %320 = vst [vmem:[#allocation2] sm:$0xff] %v314
      %321 = vst [vmem:[#allocation2 + $0x8] sm:$0xff] %v315
      %322 = vst [vmem:[#allocation2 + $0x10] sm:$0xff] %v316
      %323 = vst [vmem:[#allocation2 + $0x18] sm:$0xff] %v317
      %324 = vst [vmem:[#allocation2 + $0x20] sm:$0xff] %v318
      %325 = vst [vmem:[#allocation2 + $0x28] sm:$0xff] %v319
    $region33: #{tpu_custom_call.1} parent=1 // pred_fallthru
      _
    %p326 = scmp.ge.s32.totalorder %s303, 0
    // Predicated region
    $region34: #{tpu_custom_call.1} parent=1 // pred_check
      %p327 = pneg %p326
    $region35: #{tpu_custom_call.1} parent=1 // pred_check_branch
      %329 = sbr.rel (%p327) target = $region37
    $region36: #{tpu_custom_call.1} parent=1 // pred_region
      %s330 = smul.u32 %s303, 48
      %v331 = vlaneseq
      %v332 = vshrl.u32 %v331, 7
      %v333 = vadd.s32 %v332, 8
      %v334 = vadd.s32 %v332, 16
      %v335 = vadd.s32 %v332, 24
      %v336 = vadd.s32 %v332, 32
      %v337 = vadd.s32 %v332, 40
      %v338 = vstv %s330
      %v339 = vadd.s32 %v338, %v332
      %v340 = vadd.s32 %v338, %v333
      %v341 = vadd.s32 %v338, %v334
      %v342 = vadd.s32 %v338, %v335
      %v343 = vadd.s32 %v338, %v336
      %v344 = vadd.s32 %v338, %v337
      %v345 = vld [vmem:[#allocation2] sm:$0xff]
      %v346 = vld [vmem:[#allocation2 + $0x8] sm:$0xff]
      %v347 = vld [vmem:[#allocation2 + $0x10] sm:$0xff]
      %v348 = vld [vmem:[#allocation2 + $0x18] sm:$0xff]
      %v349 = vld [vmem:[#allocation2 + $0x20] sm:$0xff]
      %v350 = vld [vmem:[#allocation2 + $0x28] sm:$0xff]
      %vm351 = vcmp.lt.s32.totalorder %v339, 34
      %vm352 = vcmp.lt.s32.totalorder %v340, 34
      %vm353 = vcmp.lt.s32.totalorder %v341, 34
      %vm354 = vcmp.lt.s32.totalorder %v342, 34
      %vm355 = vcmp.lt.s32.totalorder %v343, 34
      %vm356 = vcmp.lt.s32.totalorder %v344, 34
      %v357 = vsel %vm351, %v297, 0.0
      %v358 = vsel %vm352, %v298, 0.0
      %v359 = vsel %vm353, %v299, 0.0
      %v360 = vsel %vm354, %v300, 0.0
      %v361 = vsel %vm355, %v301, 0.0
      %v362 = vsel %vm356, %v302, 0.0
      %v363 = vadd.f32 %v345, %v357
      %v364 = vadd.f32 %v346, %v358
      %v365 = vadd.f32 %v347, %v359
      %v366 = vadd.f32 %v348, %v360
      %v367 = vadd.f32 %v349, %v361
      %v368 = vadd.f32 %v350, %v362
      %369 = vst [vmem:[#allocation2] sm:$0xff] %v363
      %370 = vst [vmem:[#allocation2 + $0x8] sm:$0xff] %v364
      %371 = vst [vmem:[#allocation2 + $0x10] sm:$0xff] %v365
      %372 = vst [vmem:[#allocation2 + $0x18] sm:$0xff] %v366
      %373 = vst [vmem:[#allocation2 + $0x20] sm:$0xff] %v367
      %374 = vst [vmem:[#allocation2 + $0x28] sm:$0xff] %v368
    $region37: #{tpu_custom_call.1} parent=1 // pred_fallthru
      _
    // Predicated region
    $region38: #{tpu_custom_call.1} parent=1 // pred_check
      %p375 = pneg %p54
    $region39: #{tpu_custom_call.1} parent=1 // pred_check_branch
      %377 = sbr.rel (%p375) target = $region41
    $region40: #{tpu_custom_call.1} parent=1 // pred_region
      %v378 = vld [vmem:[#allocation2] sm:$0xff]
      %v379 = vld [vmem:[#allocation2 + $0x8] sm:$0xff]
      %v380 = vld [vmem:[#allocation2 + $0x10] sm:$0xff]
      %v381 = vld [vmem:[#allocation2 + $0x18] sm:$0xff]
      %v382 = vld [vmem:[#allocation2 + $0x20] sm:$0xff]
      %v383 = vld [vmem:[#allocation2 + $0x28] sm:$0xff]
      %v384 = vadd.f32 %v378, %v379
      %v385 = vadd.f32 %v384, %v380
      %v386 = vadd.f32 %v385, %v381
      %v387 = vadd.f32 %v386, %v382
      %v388 = vadd.f32 %v387, %v383
      %v389 = vrot.slane %v388, 4
      %v390 = vadd.f32 %v388, %v389
      %v391 = vrot.slane %v390, 2
      %v392 = vadd.f32 %v390, %v391
      %v393 = vrot.slane %v392, 1
      %v394 = vadd.f32 %v392, %v393
      %v395 = vld [vmem:[%s3] sm:$0x1]
      %v396 = vmul.f32 %v394, %v395
      %397 = vst [vmem:[#allocation8] sm:$0x1] %v396
    $region41: #{tpu_custom_call.1} parent=1 // pred_fallthru
      _
    // Predicated region
    $region42: #{tpu_custom_call.1} parent=1 // pred_check
      _
    $region43: #{tpu_custom_call.1} parent=1 // pred_check_branch
      %399 = sbr.rel (0) target = $region45
    $region44: #{tpu_custom_call.1} parent=1 // pred_region
      %s401 = ssub.s32 16, 16
      %402 = vsyncadd [#allocation5], %s401
      %s404 = sshll.u32 [#allocation8], 4
      %s405 = int_to_ptr.vmem [resolvable:$true] %s404
      %407 = dma.vmem_to_hbm [thread:$0]  %s405, 16, %s4, [#allocation5]
    $region45: #{tpu_custom_call.1} parent=1 // pred_fallthru
      _
    // Predicated region
    $region46: #{tpu_custom_call.1} parent=1 // pred_check
      _
    $region47: #{tpu_custom_call.1} parent=1 // pred_check_branch
      %409 = sbr.rel (0) target = $region49
    $region48: #{tpu_custom_call.1} parent=1 // pred_region
      %410 = dma.done [#allocation5], 16
    $region49: #{tpu_custom_call.1} parent=1 // pred_fallthru
      _
    %411 = vsyncpa [#allocation4], 1
    %412 = vsyncpa [#allocation7], 1
    %413 = vsyncpa [#allocation5], 1

</llo_original>
